<compile_context>
chip_gen: v7x
topology: tpu7x:2x2x1
jax: 0.10.0
libtpu: 0.0.40
codegen_flags: <defaults>
</compile_context>

<pallas_src>
import functools

import jax
import jax.numpy as jnp
from jax.experimental import pallas as pl
from jax.experimental.pallas import tpu as pltpu


def _volume_stabilizer_kernel(vol_ref, const_ref, ag_ref, cg_ref,
                              beta_ref, w2_ref, out_ref, *, h2):
    # vol_ref / out_ref : (TILE_R, 128) VMEM — rows of flattened volume, lane-dense.
    # const_ref         : (6,)  SMEM f32  [median, 1/(mad+1e-5), A, C, D, b2]
    # ag/cg/beta/w2     : (H2,) SMEM f32  per-hidden-unit scalars (gamma folded
    #                     into ag/cg).
    x = vol_ref[...]
    med = const_ref[0]
    inv_mad = const_ref[1]
    var_a = const_ref[2]
    var_c = const_ref[3]
    var_d = const_ref[4]
    b2 = const_ref[5]

    # Robust normalization + clamp (VPU).
    xn = jnp.clip((x - med) * inv_mad, -3.0, 3.0)

    # Algebraic LayerNorm statistics: h_j = xn*w1_j + b1_j  =>
    #   h_j - mu = xn*a_j + c_j,   var = xn^2*A + 2*xn*C + D
    var = (xn * xn) * var_a + (2.0 * var_c) * xn + var_d
    inv_std = jax.lax.rsqrt(var + 1e-5)            # EUP

    # ReLU'd hidden units + final Linear(H2, 1), fully on the VPU.
    acc = jnp.full_like(xn, b2)
    for j in range(h2):                            # static unroll (H2 is small)
        t = (xn * ag_ref[j] + cg_ref[j]) * inv_std + beta_ref[j]
        acc = acc + jnp.maximum(t, 0.0) * w2_ref[j]
    out_ref[...] = acc


def volume_stabilizer_forward(volume, params, *, tile_rows=256):
    """volume: (B, S, 1) float32 -> (B, S, 1) float32 (eval-mode forward)."""
    B, S, one = volume.shape
    assert one == 1
    N = B * S
    H2 = params["w1"].shape[1]

    # ---- fold eval-mode constants on the wrapper side (tiny, one-time) ----
    w1 = params["w1"][0].astype(jnp.float32)        # (H2,)
    b1 = params["b1"][0].astype(jnp.float32)        # (H2,)
    gamma = params["gamma"][0].astype(jnp.float32)  # (H2,)
    beta = params["beta"][0].astype(jnp.float32)    # (H2,)
    w2 = params["w2"][:, 0].astype(jnp.float32)     # (H2,)

    mw = jnp.mean(w1)
    mb = jnp.mean(b1)
    a = w1 - mw
    c = b1 - mb
    var_a = jnp.mean(a * a)
    var_c = jnp.mean(a * c)
    var_d = jnp.mean(c * c)
    ag = a * gamma                                  # gamma folded in
    cg = c * gamma

    med = params["running_median"].reshape(())
    inv_mad = 1.0 / (params["running_mad"].reshape(()) + 1e-5)
    b2 = params["b2"].reshape(())
    const = jnp.stack([med, inv_mad, var_a, var_c, var_d, b2]).astype(jnp.float32)

    # ---- lane-dense layout: pad N to a tile multiple, rows on the lane axis ----
    rows = -(-N // 128)                                  # cdiv(N, 128)
    tile_r = min(tile_rows, ((rows + 7) // 8) * 8)       # multiple of 8 sublanes
    padded_rows = -(-rows // tile_r) * tile_r
    pad_n = padded_rows * 128
    vol_flat = volume.reshape(N).astype(jnp.float32)
    vol2d = jnp.pad(vol_flat, (0, pad_n - N)).reshape(padded_rows, 128)

    grid = (padded_rows // tile_r,)
    smem_spec = pl.BlockSpec(memory_space=pltpu.MemorySpace.SMEM)

    cost = pl.CostEstimate(
        flops=int(pad_n * (7 * H2 + 10)),
        transcendentals=int(pad_n),
        bytes_accessed=int(8 * pad_n),
    )

    out2d = pl.pallas_call(
        functools.partial(_volume_stabilizer_kernel, h2=H2),
        out_shape=jax.ShapeDtypeStruct((padded_rows, 128), jnp.float32),
        grid=grid,
        in_specs=[
            pl.BlockSpec((tile_r, 128), lambda i: (i, 0)),   # volume tile
            smem_spec,                                        # scalar constants
            smem_spec, smem_spec, smem_spec, smem_spec,       # ag, cg, beta, w2
        ],
        out_specs=pl.BlockSpec((tile_r, 128), lambda i: (i, 0)),
        compiler_params=pltpu.CompilerParams(
            dimension_semantics=("parallel",),
        ),
        cost_estimate=cost,
    )(vol2d, const, ag, cg, beta, w2)

    return out2d.reshape(-1)[:N].reshape(B, S, 1)


def init_params(key, hidden_dim):
    H2 = hidden_dim // 2
    k1, k2, k3, k4 = jax.random.split(key, 4)
    # Deterministic synthetic init mimicking nn.Linear default scales.
    w1 = jax.random.uniform(k1, (1, H2), jnp.float32, -1.0, 1.0)      # Linear(1,H2).weight.T
    b1 = jax.random.uniform(k2, (1, H2), jnp.float32, -1.0, 1.0)
    bound2 = 1.0 / jnp.sqrt(H2)
    w2 = jax.random.uniform(k3, (H2, 1), jnp.float32, -bound2, bound2)  # Linear(H2,1).weight.T
    b2 = jax.random.uniform(k4, (1, 1), jnp.float32, -bound2, bound2)
    return {
        "w1": w1,
        "b1": b1,
        "gamma": jnp.ones((1, H2), jnp.float32),   # LayerNorm weight
        "beta": jnp.zeros((1, H2), jnp.float32),   # LayerNorm bias
        "w2": w2,
        "b2": b2,
        # Registered buffers (eval mode: fixed)
        "running_median": jnp.zeros((1, 1), jnp.float32),
        "running_mad": jnp.ones((1, 1), jnp.float32),
    }


def reference_forward(volume, params):
    """Plain-JAX reference mirroring the PyTorch eval forward (direct LayerNorm)."""
    med = params["running_median"][0, 0]
    mad = params["running_mad"][0, 0]
    xn = jnp.clip((volume - med) / (mad + 1e-5), -3.0, 3.0)     # (B,S,1)
    h = xn * params["w1"][0] + params["b1"][0]                  # (B,S,H2)
    mu = jnp.mean(h, axis=-1, keepdims=True)
    var = jnp.mean((h - mu) ** 2, axis=-1, keepdims=True)
    h = (h - mu) / jnp.sqrt(var + 1e-5)
    h = h * params["gamma"][0] + params["beta"][0]
    h = jnp.maximum(h, 0.0)
    return h @ params["w2"] + params["b2"][0, 0]


if __name__ == "__main__":
    hidden_dim = 32
    B, S = 2, 8

    key = jax.random.PRNGKey(0)
    k_param, k_vol = jax.random.split(key)
    params = init_params(k_param, hidden_dim)

    # Synthetic "volume" data: positive, scalar feature per timestep.
    volume = jnp.exp(jax.random.normal(k_vol, (B, S, 1), jnp.float32))

    out = volume_stabilizer_forward(volume, params)
    out = jax.block_until_ready(out)

    ref = reference_forward(volume, params)
    assert out.shape == (B, S, 1)
    # Algebraic LayerNorm rewrite changes f32 rounding slightly; keep a tight
    # but non-flaky tolerance.
    assert jnp.allclose(out, ref, atol=2e-5, rtol=1e-5)

    print("KERNEL_OK")
</pallas_src>

<mosaic_0001>
module attributes {stable_mosaic.version = 11 : i64} {
  func.func @_volume_stabilizer_kernel(%arg0: i32, %arg1: memref<8x128xf32, #tpu.memory_space<vmem>>, %arg2: memref<6xf32, #tpu.memory_space<smem>>, %arg3: memref<16xf32, #tpu.memory_space<smem>>, %arg4: memref<16xf32, #tpu.memory_space<smem>>, %arg5: memref<16xf32, #tpu.memory_space<smem>>, %arg6: memref<16xf32, #tpu.memory_space<smem>>, %arg7: memref<8x128xf32, #tpu.memory_space<vmem>>) attributes {dimension_semantics = [#tpu.dimension_semantics<parallel>], iteration_bounds = array<i64: 1>, scalar_prefetch = 0 : i64, scratch_operands = 0 : i64, tpu.core_type = #tpu.core_type<tc>, window_params = [{transform_indices = @transform_0, window_bounds = array<i64: 8, 128>}, {transform_indices = @transform_1, window_bounds = array<i64: 6>}, {transform_indices = @transform_2, window_bounds = array<i64: 16>}, {transform_indices = @transform_3, window_bounds = array<i64: 16>}, {transform_indices = @transform_4, window_bounds = array<i64: 16>}, {transform_indices = @transform_5, window_bounds = array<i64: 16>}, {transform_indices = @transform_6, window_bounds = array<i64: 8, 128>}]} {
    %c0 = arith.constant 0 : index
    %c0_0 = arith.constant 0 : index
    %0 = vector.load %arg1[%c0, %c0_0] : memref<8x128xf32, #tpu.memory_space<vmem>>, vector<8x128xf32>
    %c0_1 = arith.constant 0 : index
    %1 = memref.load %arg2[%c0_1] : memref<6xf32, #tpu.memory_space<smem>>
    %c1 = arith.constant 1 : index
    %2 = memref.load %arg2[%c1] : memref<6xf32, #tpu.memory_space<smem>>
    %c2 = arith.constant 2 : index
    %3 = memref.load %arg2[%c2] : memref<6xf32, #tpu.memory_space<smem>>
    %c3 = arith.constant 3 : index
    %4 = memref.load %arg2[%c3] : memref<6xf32, #tpu.memory_space<smem>>
    %c4 = arith.constant 4 : index
    %5 = memref.load %arg2[%c4] : memref<6xf32, #tpu.memory_space<smem>>
    %c5 = arith.constant 5 : index
    %6 = memref.load %arg2[%c5] : memref<6xf32, #tpu.memory_space<smem>>
    %7 = vector.broadcast %1 : f32 to vector<8x128xf32>
    %8 = arith.subf %0, %7 : vector<8x128xf32>
    %9 = vector.broadcast %2 : f32 to vector<8x128xf32>
    %10 = arith.mulf %8, %9 : vector<8x128xf32>
    %cst = arith.constant -3.000000e+00 : f32
    %cst_2 = arith.constant 3.000000e+00 : f32
    %11 = vector.broadcast %cst : f32 to vector<8x128xf32>
    %12 = arith.maximumf %11, %10 : vector<8x128xf32>
    %13 = vector.broadcast %cst_2 : f32 to vector<8x128xf32>
    %14 = arith.minimumf %13, %12 : vector<8x128xf32>
    %15 = arith.mulf %14, %14 : vector<8x128xf32>
    %16 = vector.broadcast %3 : f32 to vector<8x128xf32>
    %17 = arith.mulf %15, %16 : vector<8x128xf32>
    %cst_3 = arith.constant 2.000000e+00 : f32
    %18 = arith.mulf %cst_3, %4 : f32
    %19 = vector.broadcast %18 : f32 to vector<8x128xf32>
    %20 = arith.mulf %19, %14 : vector<8x128xf32>
    %21 = arith.addf %17, %20 : vector<8x128xf32>
    %22 = vector.broadcast %5 : f32 to vector<8x128xf32>
    %23 = arith.addf %21, %22 : vector<8x128xf32>
    %cst_4 = arith.constant 9.99999974E-6 : f32
    %24 = vector.broadcast %cst_4 : f32 to vector<8x128xf32>
    %25 = arith.addf %23, %24 : vector<8x128xf32>
    %26 = math.rsqrt %25 : vector<8x128xf32>
    %27 = vector.broadcast %6 : f32 to vector<8x128xf32>
    %c0_5 = arith.constant 0 : index
    %28 = memref.load %arg3[%c0_5] : memref<16xf32, #tpu.memory_space<smem>>
    %29 = vector.broadcast %28 : f32 to vector<8x128xf32>
    %30 = arith.mulf %14, %29 : vector<8x128xf32>
    %c0_6 = arith.constant 0 : index
    %31 = memref.load %arg4[%c0_6] : memref<16xf32, #tpu.memory_space<smem>>
    %32 = vector.broadcast %31 : f32 to vector<8x128xf32>
    %33 = arith.addf %30, %32 : vector<8x128xf32>
    %34 = arith.mulf %33, %26 : vector<8x128xf32>
    %c0_7 = arith.constant 0 : index
    %35 = memref.load %arg5[%c0_7] : memref<16xf32, #tpu.memory_space<smem>>
    %36 = vector.broadcast %35 : f32 to vector<8x128xf32>
    %37 = arith.addf %34, %36 : vector<8x128xf32>
    %cst_8 = arith.constant 0.000000e+00 : f32
    %38 = vector.broadcast %cst_8 : f32 to vector<8x128xf32>
    %39 = arith.maximumf %37, %38 : vector<8x128xf32>
    %c0_9 = arith.constant 0 : index
    %40 = memref.load %arg6[%c0_9] : memref<16xf32, #tpu.memory_space<smem>>
    %41 = vector.broadcast %40 : f32 to vector<8x128xf32>
    %42 = arith.mulf %39, %41 : vector<8x128xf32>
    %43 = arith.addf %27, %42 : vector<8x128xf32>
    %c1_10 = arith.constant 1 : index
    %44 = memref.load %arg3[%c1_10] : memref<16xf32, #tpu.memory_space<smem>>
    %45 = vector.broadcast %44 : f32 to vector<8x128xf32>
    %46 = arith.mulf %14, %45 : vector<8x128xf32>
    %c1_11 = arith.constant 1 : index
    %47 = memref.load %arg4[%c1_11] : memref<16xf32, #tpu.memory_space<smem>>
    %48 = vector.broadcast %47 : f32 to vector<8x128xf32>
    %49 = arith.addf %46, %48 : vector<8x128xf32>
    %50 = arith.mulf %49, %26 : vector<8x128xf32>
    %c1_12 = arith.constant 1 : index
    %51 = memref.load %arg5[%c1_12] : memref<16xf32, #tpu.memory_space<smem>>
    %52 = vector.broadcast %51 : f32 to vector<8x128xf32>
    %53 = arith.addf %50, %52 : vector<8x128xf32>
    %cst_13 = arith.constant 0.000000e+00 : f32
    %54 = vector.broadcast %cst_13 : f32 to vector<8x128xf32>
    %55 = arith.maximumf %53, %54 : vector<8x128xf32>
    %c1_14 = arith.constant 1 : index
    %56 = memref.load %arg6[%c1_14] : memref<16xf32, #tpu.memory_space<smem>>
    %57 = vector.broadcast %56 : f32 to vector<8x128xf32>
    %58 = arith.mulf %55, %57 : vector<8x128xf32>
    %59 = arith.addf %43, %58 : vector<8x128xf32>
    %c2_15 = arith.constant 2 : index
    %60 = memref.load %arg3[%c2_15] : memref<16xf32, #tpu.memory_space<smem>>
    %61 = vector.broadcast %60 : f32 to vector<8x128xf32>
    %62 = arith.mulf %14, %61 : vector<8x128xf32>
    %c2_16 = arith.constant 2 : index
    %63 = memref.load %arg4[%c2_16] : memref<16xf32, #tpu.memory_space<smem>>
    %64 = vector.broadcast %63 : f32 to vector<8x128xf32>
    %65 = arith.addf %62, %64 : vector<8x128xf32>
    %66 = arith.mulf %65, %26 : vector<8x128xf32>
    %c2_17 = arith.constant 2 : index
    %67 = memref.load %arg5[%c2_17] : memref<16xf32, #tpu.memory_space<smem>>
    %68 = vector.broadcast %67 : f32 to vector<8x128xf32>
    %69 = arith.addf %66, %68 : vector<8x128xf32>
    %cst_18 = arith.constant 0.000000e+00 : f32
    %70 = vector.broadcast %cst_18 : f32 to vector<8x128xf32>
    %71 = arith.maximumf %69, %70 : vector<8x128xf32>
    %c2_19 = arith.constant 2 : index
    %72 = memref.load %arg6[%c2_19] : memref<16xf32, #tpu.memory_space<smem>>
    %73 = vector.broadcast %72 : f32 to vector<8x128xf32>
    %74 = arith.mulf %71, %73 : vector<8x128xf32>
    %75 = arith.addf %59, %74 : vector<8x128xf32>
    %c3_20 = arith.constant 3 : index
    %76 = memref.load %arg3[%c3_20] : memref<16xf32, #tpu.memory_space<smem>>
    %77 = vector.broadcast %76 : f32 to vector<8x128xf32>
    %78 = arith.mulf %14, %77 : vector<8x128xf32>
    %c3_21 = arith.constant 3 : index
    %79 = memref.load %arg4[%c3_21] : memref<16xf32, #tpu.memory_space<smem>>
    %80 = vector.broadcast %79 : f32 to vector<8x128xf32>
    %81 = arith.addf %78, %80 : vector<8x128xf32>
    %82 = arith.mulf %81, %26 : vector<8x128xf32>
    %c3_22 = arith.constant 3 : index
    %83 = memref.load %arg5[%c3_22] : memref<16xf32, #tpu.memory_space<smem>>
    %84 = vector.broadcast %83 : f32 to vector<8x128xf32>
    %85 = arith.addf %82, %84 : vector<8x128xf32>
    %cst_23 = arith.constant 0.000000e+00 : f32
    %86 = vector.broadcast %cst_23 : f32 to vector<8x128xf32>
    %87 = arith.maximumf %85, %86 : vector<8x128xf32>
    %c3_24 = arith.constant 3 : index
    %88 = memref.load %arg6[%c3_24] : memref<16xf32, #tpu.memory_space<smem>>
    %89 = vector.broadcast %88 : f32 to vector<8x128xf32>
    %90 = arith.mulf %87, %89 : vector<8x128xf32>
    %91 = arith.addf %75, %90 : vector<8x128xf32>
    %c4_25 = arith.constant 4 : index
    %92 = memref.load %arg3[%c4_25] : memref<16xf32, #tpu.memory_space<smem>>
    %93 = vector.broadcast %92 : f32 to vector<8x128xf32>
    %94 = arith.mulf %14, %93 : vector<8x128xf32>
    %c4_26 = arith.constant 4 : index
    %95 = memref.load %arg4[%c4_26] : memref<16xf32, #tpu.memory_space<smem>>
    %96 = vector.broadcast %95 : f32 to vector<8x128xf32>
    %97 = arith.addf %94, %96 : vector<8x128xf32>
    %98 = arith.mulf %97, %26 : vector<8x128xf32>
    %c4_27 = arith.constant 4 : index
    %99 = memref.load %arg5[%c4_27] : memref<16xf32, #tpu.memory_space<smem>>
    %100 = vector.broadcast %99 : f32 to vector<8x128xf32>
    %101 = arith.addf %98, %100 : vector<8x128xf32>
    %cst_28 = arith.constant 0.000000e+00 : f32
    %102 = vector.broadcast %cst_28 : f32 to vector<8x128xf32>
    %103 = arith.maximumf %101, %102 : vector<8x128xf32>
    %c4_29 = arith.constant 4 : index
    %104 = memref.load %arg6[%c4_29] : memref<16xf32, #tpu.memory_space<smem>>
    %105 = vector.broadcast %104 : f32 to vector<8x128xf32>
    %106 = arith.mulf %103, %105 : vector<8x128xf32>
    %107 = arith.addf %91, %106 : vector<8x128xf32>
    %c5_30 = arith.constant 5 : index
    %108 = memref.load %arg3[%c5_30] : memref<16xf32, #tpu.memory_space<smem>>
    %109 = vector.broadcast %108 : f32 to vector<8x128xf32>
    %110 = arith.mulf %14, %109 : vector<8x128xf32>
    %c5_31 = arith.constant 5 : index
    %111 = memref.load %arg4[%c5_31] : memref<16xf32, #tpu.memory_space<smem>>
    %112 = vector.broadcast %111 : f32 to vector<8x128xf32>
    %113 = arith.addf %110, %112 : vector<8x128xf32>
    %114 = arith.mulf %113, %26 : vector<8x128xf32>
    %c5_32 = arith.constant 5 : index
    %115 = memref.load %arg5[%c5_32] : memref<16xf32, #tpu.memory_space<smem>>
    %116 = vector.broadcast %115 : f32 to vector<8x128xf32>
    %117 = arith.addf %114, %116 : vector<8x128xf32>
    %cst_33 = arith.constant 0.000000e+00 : f32
    %118 = vector.broadcast %cst_33 : f32 to vector<8x128xf32>
    %119 = arith.maximumf %117, %118 : vector<8x128xf32>
    %c5_34 = arith.constant 5 : index
    %120 = memref.load %arg6[%c5_34] : memref<16xf32, #tpu.memory_space<smem>>
    %121 = vector.broadcast %120 : f32 to vector<8x128xf32>
    %122 = arith.mulf %119, %121 : vector<8x128xf32>
    %123 = arith.addf %107, %122 : vector<8x128xf32>
    %c6 = arith.constant 6 : index
    %124 = memref.load %arg3[%c6] : memref<16xf32, #tpu.memory_space<smem>>
    %125 = vector.broadcast %124 : f32 to vector<8x128xf32>
    %126 = arith.mulf %14, %125 : vector<8x128xf32>
    %c6_35 = arith.constant 6 : index
    %127 = memref.load %arg4[%c6_35] : memref<16xf32, #tpu.memory_space<smem>>
    %128 = vector.broadcast %127 : f32 to vector<8x128xf32>
    %129 = arith.addf %126, %128 : vector<8x128xf32>
    %130 = arith.mulf %129, %26 : vector<8x128xf32>
    %c6_36 = arith.constant 6 : index
    %131 = memref.load %arg5[%c6_36] : memref<16xf32, #tpu.memory_space<smem>>
    %132 = vector.broadcast %131 : f32 to vector<8x128xf32>
    %133 = arith.addf %130, %132 : vector<8x128xf32>
    %cst_37 = arith.constant 0.000000e+00 : f32
    %134 = vector.broadcast %cst_37 : f32 to vector<8x128xf32>
    %135 = arith.maximumf %133, %134 : vector<8x128xf32>
    %c6_38 = arith.constant 6 : index
    %136 = memref.load %arg6[%c6_38] : memref<16xf32, #tpu.memory_space<smem>>
    %137 = vector.broadcast %136 : f32 to vector<8x128xf32>
    %138 = arith.mulf %135, %137 : vector<8x128xf32>
    %139 = arith.addf %123, %138 : vector<8x128xf32>
    %c7 = arith.constant 7 : index
    %140 = memref.load %arg3[%c7] : memref<16xf32, #tpu.memory_space<smem>>
    %141 = vector.broadcast %140 : f32 to vector<8x128xf32>
    %142 = arith.mulf %14, %141 : vector<8x128xf32>
    %c7_39 = arith.constant 7 : index
    %143 = memref.load %arg4[%c7_39] : memref<16xf32, #tpu.memory_space<smem>>
    %144 = vector.broadcast %143 : f32 to vector<8x128xf32>
    %145 = arith.addf %142, %144 : vector<8x128xf32>
    %146 = arith.mulf %145, %26 : vector<8x128xf32>
    %c7_40 = arith.constant 7 : index
    %147 = memref.load %arg5[%c7_40] : memref<16xf32, #tpu.memory_space<smem>>
    %148 = vector.broadcast %147 : f32 to vector<8x128xf32>
    %149 = arith.addf %146, %148 : vector<8x128xf32>
    %cst_41 = arith.constant 0.000000e+00 : f32
    %150 = vector.broadcast %cst_41 : f32 to vector<8x128xf32>
    %151 = arith.maximumf %149, %150 : vector<8x128xf32>
    %c7_42 = arith.constant 7 : index
    %152 = memref.load %arg6[%c7_42] : memref<16xf32, #tpu.memory_space<smem>>
    %153 = vector.broadcast %152 : f32 to vector<8x128xf32>
    %154 = arith.mulf %151, %153 : vector<8x128xf32>
    %155 = arith.addf %139, %154 : vector<8x128xf32>
    %c8 = arith.constant 8 : index
    %156 = memref.load %arg3[%c8] : memref<16xf32, #tpu.memory_space<smem>>
    %157 = vector.broadcast %156 : f32 to vector<8x128xf32>
    %158 = arith.mulf %14, %157 : vector<8x128xf32>
    %c8_43 = arith.constant 8 : index
    %159 = memref.load %arg4[%c8_43] : memref<16xf32, #tpu.memory_space<smem>>
    %160 = vector.broadcast %159 : f32 to vector<8x128xf32>
    %161 = arith.addf %158, %160 : vector<8x128xf32>
    %162 = arith.mulf %161, %26 : vector<8x128xf32>
    %c8_44 = arith.constant 8 : index
    %163 = memref.load %arg5[%c8_44] : memref<16xf32, #tpu.memory_space<smem>>
    %164 = vector.broadcast %163 : f32 to vector<8x128xf32>
    %165 = arith.addf %162, %164 : vector<8x128xf32>
    %cst_45 = arith.constant 0.000000e+00 : f32
    %166 = vector.broadcast %cst_45 : f32 to vector<8x128xf32>
    %167 = arith.maximumf %165, %166 : vector<8x128xf32>
    %c8_46 = arith.constant 8 : index
    %168 = memref.load %arg6[%c8_46] : memref<16xf32, #tpu.memory_space<smem>>
    %169 = vector.broadcast %168 : f32 to vector<8x128xf32>
    %170 = arith.mulf %167, %169 : vector<8x128xf32>
    %171 = arith.addf %155, %170 : vector<8x128xf32>
    %c9 = arith.constant 9 : index
    %172 = memref.load %arg3[%c9] : memref<16xf32, #tpu.memory_space<smem>>
    %173 = vector.broadcast %172 : f32 to vector<8x128xf32>
    %174 = arith.mulf %14, %173 : vector<8x128xf32>
    %c9_47 = arith.constant 9 : index
    %175 = memref.load %arg4[%c9_47] : memref<16xf32, #tpu.memory_space<smem>>
    %176 = vector.broadcast %175 : f32 to vector<8x128xf32>
    %177 = arith.addf %174, %176 : vector<8x128xf32>
    %178 = arith.mulf %177, %26 : vector<8x128xf32>
    %c9_48 = arith.constant 9 : index
    %179 = memref.load %arg5[%c9_48] : memref<16xf32, #tpu.memory_space<smem>>
    %180 = vector.broadcast %179 : f32 to vector<8x128xf32>
    %181 = arith.addf %178, %180 : vector<8x128xf32>
    %cst_49 = arith.constant 0.000000e+00 : f32
    %182 = vector.broadcast %cst_49 : f32 to vector<8x128xf32>
    %183 = arith.maximumf %181, %182 : vector<8x128xf32>
    %c9_50 = arith.constant 9 : index
    %184 = memref.load %arg6[%c9_50] : memref<16xf32, #tpu.memory_space<smem>>
    %185 = vector.broadcast %184 : f32 to vector<8x128xf32>
    %186 = arith.mulf %183, %185 : vector<8x128xf32>
    %187 = arith.addf %171, %186 : vector<8x128xf32>
    %c10 = arith.constant 10 : index
    %188 = memref.load %arg3[%c10] : memref<16xf32, #tpu.memory_space<smem>>
    %189 = vector.broadcast %188 : f32 to vector<8x128xf32>
    %190 = arith.mulf %14, %189 : vector<8x128xf32>
    %c10_51 = arith.constant 10 : index
    %191 = memref.load %arg4[%c10_51] : memref<16xf32, #tpu.memory_space<smem>>
    %192 = vector.broadcast %191 : f32 to vector<8x128xf32>
    %193 = arith.addf %190, %192 : vector<8x128xf32>
    %194 = arith.mulf %193, %26 : vector<8x128xf32>
    %c10_52 = arith.constant 10 : index
    %195 = memref.load %arg5[%c10_52] : memref<16xf32, #tpu.memory_space<smem>>
    %196 = vector.broadcast %195 : f32 to vector<8x128xf32>
    %197 = arith.addf %194, %196 : vector<8x128xf32>
    %cst_53 = arith.constant 0.000000e+00 : f32
    %198 = vector.broadcast %cst_53 : f32 to vector<8x128xf32>
    %199 = arith.maximumf %197, %198 : vector<8x128xf32>
    %c10_54 = arith.constant 10 : index
    %200 = memref.load %arg6[%c10_54] : memref<16xf32, #tpu.memory_space<smem>>
    %201 = vector.broadcast %200 : f32 to vector<8x128xf32>
    %202 = arith.mulf %199, %201 : vector<8x128xf32>
    %203 = arith.addf %187, %202 : vector<8x128xf32>
    %c11 = arith.constant 11 : index
    %204 = memref.load %arg3[%c11] : memref<16xf32, #tpu.memory_space<smem>>
    %205 = vector.broadcast %204 : f32 to vector<8x128xf32>
    %206 = arith.mulf %14, %205 : vector<8x128xf32>
    %c11_55 = arith.constant 11 : index
    %207 = memref.load %arg4[%c11_55] : memref<16xf32, #tpu.memory_space<smem>>
    %208 = vector.broadcast %207 : f32 to vector<8x128xf32>
    %209 = arith.addf %206, %208 : vector<8x128xf32>
    %210 = arith.mulf %209, %26 : vector<8x128xf32>
    %c11_56 = arith.constant 11 : index
    %211 = memref.load %arg5[%c11_56] : memref<16xf32, #tpu.memory_space<smem>>
    %212 = vector.broadcast %211 : f32 to vector<8x128xf32>
    %213 = arith.addf %210, %212 : vector<8x128xf32>
    %cst_57 = arith.constant 0.000000e+00 : f32
    %214 = vector.broadcast %cst_57 : f32 to vector<8x128xf32>
    %215 = arith.maximumf %213, %214 : vector<8x128xf32>
    %c11_58 = arith.constant 11 : index
    %216 = memref.load %arg6[%c11_58] : memref<16xf32, #tpu.memory_space<smem>>
    %217 = vector.broadcast %216 : f32 to vector<8x128xf32>
    %218 = arith.mulf %215, %217 : vector<8x128xf32>
    %219 = arith.addf %203, %218 : vector<8x128xf32>
    %c12 = arith.constant 12 : index
    %220 = memref.load %arg3[%c12] : memref<16xf32, #tpu.memory_space<smem>>
    %221 = vector.broadcast %220 : f32 to vector<8x128xf32>
    %222 = arith.mulf %14, %221 : vector<8x128xf32>
    %c12_59 = arith.constant 12 : index
    %223 = memref.load %arg4[%c12_59] : memref<16xf32, #tpu.memory_space<smem>>
    %224 = vector.broadcast %223 : f32 to vector<8x128xf32>
    %225 = arith.addf %222, %224 : vector<8x128xf32>
    %226 = arith.mulf %225, %26 : vector<8x128xf32>
    %c12_60 = arith.constant 12 : index
    %227 = memref.load %arg5[%c12_60] : memref<16xf32, #tpu.memory_space<smem>>
    %228 = vector.broadcast %227 : f32 to vector<8x128xf32>
    %229 = arith.addf %226, %228 : vector<8x128xf32>
    %cst_61 = arith.constant 0.000000e+00 : f32
    %230 = vector.broadcast %cst_61 : f32 to vector<8x128xf32>
    %231 = arith.maximumf %229, %230 : vector<8x128xf32>
    %c12_62 = arith.constant 12 : index
    %232 = memref.load %arg6[%c12_62] : memref<16xf32, #tpu.memory_space<smem>>
    %233 = vector.broadcast %232 : f32 to vector<8x128xf32>
    %234 = arith.mulf %231, %233 : vector<8x128xf32>
    %235 = arith.addf %219, %234 : vector<8x128xf32>
    %c13 = arith.constant 13 : index
    %236 = memref.load %arg3[%c13] : memref<16xf32, #tpu.memory_space<smem>>
    %237 = vector.broadcast %236 : f32 to vector<8x128xf32>
    %238 = arith.mulf %14, %237 : vector<8x128xf32>
    %c13_63 = arith.constant 13 : index
    %239 = memref.load %arg4[%c13_63] : memref<16xf32, #tpu.memory_space<smem>>
    %240 = vector.broadcast %239 : f32 to vector<8x128xf32>
    %241 = arith.addf %238, %240 : vector<8x128xf32>
    %242 = arith.mulf %241, %26 : vector<8x128xf32>
    %c13_64 = arith.constant 13 : index
    %243 = memref.load %arg5[%c13_64] : memref<16xf32, #tpu.memory_space<smem>>
    %244 = vector.broadcast %243 : f32 to vector<8x128xf32>
    %245 = arith.addf %242, %244 : vector<8x128xf32>
    %cst_65 = arith.constant 0.000000e+00 : f32
    %246 = vector.broadcast %cst_65 : f32 to vector<8x128xf32>
    %247 = arith.maximumf %245, %246 : vector<8x128xf32>
    %c13_66 = arith.constant 13 : index
    %248 = memref.load %arg6[%c13_66] : memref<16xf32, #tpu.memory_space<smem>>
    %249 = vector.broadcast %248 : f32 to vector<8x128xf32>
    %250 = arith.mulf %247, %249 : vector<8x128xf32>
    %251 = arith.addf %235, %250 : vector<8x128xf32>
    %c14 = arith.constant 14 : index
    %252 = memref.load %arg3[%c14] : memref<16xf32, #tpu.memory_space<smem>>
    %253 = vector.broadcast %252 : f32 to vector<8x128xf32>
    %254 = arith.mulf %14, %253 : vector<8x128xf32>
    %c14_67 = arith.constant 14 : index
    %255 = memref.load %arg4[%c14_67] : memref<16xf32, #tpu.memory_space<smem>>
    %256 = vector.broadcast %255 : f32 to vector<8x128xf32>
    %257 = arith.addf %254, %256 : vector<8x128xf32>
    %258 = arith.mulf %257, %26 : vector<8x128xf32>
    %c14_68 = arith.constant 14 : index
    %259 = memref.load %arg5[%c14_68] : memref<16xf32, #tpu.memory_space<smem>>
    %260 = vector.broadcast %259 : f32 to vector<8x128xf32>
    %261 = arith.addf %258, %260 : vector<8x128xf32>
    %cst_69 = arith.constant 0.000000e+00 : f32
    %262 = vector.broadcast %cst_69 : f32 to vector<8x128xf32>
    %263 = arith.maximumf %261, %262 : vector<8x128xf32>
    %c14_70 = arith.constant 14 : index
    %264 = memref.load %arg6[%c14_70] : memref<16xf32, #tpu.memory_space<smem>>
    %265 = vector.broadcast %264 : f32 to vector<8x128xf32>
    %266 = arith.mulf %263, %265 : vector<8x128xf32>
    %267 = arith.addf %251, %266 : vector<8x128xf32>
    %c15 = arith.constant 15 : index
    %268 = memref.load %arg3[%c15] : memref<16xf32, #tpu.memory_space<smem>>
    %269 = vector.broadcast %268 : f32 to vector<8x128xf32>
    %270 = arith.mulf %14, %269 : vector<8x128xf32>
    %c15_71 = arith.constant 15 : index
    %271 = memref.load %arg4[%c15_71] : memref<16xf32, #tpu.memory_space<smem>>
    %272 = vector.broadcast %271 : f32 to vector<8x128xf32>
    %273 = arith.addf %270, %272 : vector<8x128xf32>
    %274 = arith.mulf %273, %26 : vector<8x128xf32>
    %c15_72 = arith.constant 15 : index
    %275 = memref.load %arg5[%c15_72] : memref<16xf32, #tpu.memory_space<smem>>
    %276 = vector.broadcast %275 : f32 to vector<8x128xf32>
    %277 = arith.addf %274, %276 : vector<8x128xf32>
    %cst_73 = arith.constant 0.000000e+00 : f32
    %278 = vector.broadcast %cst_73 : f32 to vector<8x128xf32>
    %279 = arith.maximumf %277, %278 : vector<8x128xf32>
    %c15_74 = arith.constant 15 : index
    %280 = memref.load %arg6[%c15_74] : memref<16xf32, #tpu.memory_space<smem>>
    %281 = vector.broadcast %280 : f32 to vector<8x128xf32>
    %282 = arith.mulf %279, %281 : vector<8x128xf32>
    %283 = arith.addf %267, %282 : vector<8x128xf32>
    %c0_75 = arith.constant 0 : index
    %c0_76 = arith.constant 0 : index
    %284 = vector.load %arg7[%c0_75, %c0_76] : memref<8x128xf32, #tpu.memory_space<vmem>>, vector<8x128xf32>
    tpu.vector_store %arg7[%c0_75, %c0_76], %283 {strides = array<i32>} : memref<8x128xf32, #tpu.memory_space<vmem>>, vector<8x128xf32>,
    return
  }
  func.func @transform_0(%arg0: i32) -> (i32, i32) {
    %c0_i32 = arith.constant 0 : i32
    %c0_i32_0 = arith.constant 0 : i32
    return %arg0, %c0_i32 : i32, i32
  }
  func.func @transform_1(%arg0: i32) -> i32 {
    %c0_i32 = arith.constant 0 : i32
    %c0_i32_0 = arith.constant 0 : i32
    return %c0_i32 : i32
  }
  func.func @transform_2(%arg0: i32) -> i32 {
    %c0_i32 = arith.constant 0 : i32
    %c0_i32_0 = arith.constant 0 : i32
    return %c0_i32 : i32
  }
  func.func @transform_3(%arg0: i32) -> i32 {
    %c0_i32 = arith.constant 0 : i32
    %c0_i32_0 = arith.constant 0 : i32
    return %c0_i32 : i32
  }
  func.func @transform_4(%arg0: i32) -> i32 {
    %c0_i32 = arith.constant 0 : i32
    %c0_i32_0 = arith.constant 0 : i32
    return %c0_i32 : i32
  }
  func.func @transform_5(%arg0: i32) -> i32 {
    %c0_i32 = arith.constant 0 : i32
    %c0_i32_0 = arith.constant 0 : i32
    return %c0_i32 : i32
  }
  func.func @transform_6(%arg0: i32) -> (i32, i32) {
    %c0_i32 = arith.constant 0 : i32
    %c0_i32_0 = arith.constant 0 : i32
    return %arg0, %c0_i32 : i32, i32
  }
}

</mosaic_0001>

<llo_original>
// kernel: tpu_custom_call.1
$region0: #{tpu_custom_call.1}
  #allocation0 [shape = 'u32[]', space=smem, size = 0x4, offset = 0x4, fixed_abs, tag = 'smem constant byte address 0x4 - core index']
  #allocation1 [shape = 'u32[144,128]{1,0:T(1,128)}', space=vmem, size = 0x12000, scoped, tag = 'internal scratch']
  %s0 = inlined_call_operand.hbm [shape: f32[8,128], index: 0, kind: input, shape index: {}]
  %s1 = inlined_call_operand.vmem [shape: f32[6], index: 1, kind: input, shape index: {}]
  %s2 = inlined_call_operand.vmem [shape: f32[16], index: 2, kind: input, shape index: {}]
  %s3 = inlined_call_operand.vmem [shape: f32[16], index: 3, kind: input, shape index: {}]
  %s4 = inlined_call_operand.vmem [shape: f32[16], index: 4, kind: input, shape index: {}]
  %s5 = inlined_call_operand.vmem [shape: f32[16], index: 5, kind: input, shape index: {}]
  %s6 = inlined_call_operand.hbm [shape: f32[8,128], index: 6, kind: output, shape index: {}]
  %s7 = sld [smem:[#allocation0]]
  $region58: #{tpu_custom_call.1} parent=0
    _
  %s9 = ssub.s32 1, %s7
  %s10 = scalar_select 0, %s9, %s7
  $region1: #{tpu_custom_call.1} parent=0
    #allocation2 [shape = 'u8[4096]{0}', space=vmem, size = 0x1000, scoped, tag = 'input window, operand 0, single buffered']
    #allocation3 [shape = 's32[1]{0}', space=sflag, size = 0x4, scoped, tag = 'scoped memory for tpu_custom_call.1']
    #allocation4 [shape = 's32[1]{0}', space=sflag, size = 0x4, scoped, tag = 'scoped memory for tpu_custom_call.1']
    #allocation5 [shape = 's32[1]{0}', space=sflag, size = 0x4, scoped, tag = 'scoped memory for tpu_custom_call.1']
    #allocation6 [shape = 'u8[512]{0}', space=smem, size = 0x200, scoped, tag = 'input window, operand 1, single buffered']
    #allocation7 [shape = 'u8[512]{0}', space=smem, size = 0x200, scoped, tag = 'input window, operand 2, single buffered']
    #allocation8 [shape = 's32[1]{0}', space=sflag, size = 0x4, scoped, tag = 'scoped memory for tpu_custom_call.1']
    #allocation9 [shape = 'u8[512]{0}', space=smem, size = 0x200, scoped, tag = 'input window, operand 3, single buffered']
    #allocation10 [shape = 'u8[512]{0}', space=smem, size = 0x200, scoped, tag = 'input window, operand 4, single buffered']
    #allocation11 [shape = 's32[1]{0}', space=sflag, size = 0x4, scoped, tag = 'scoped memory for tpu_custom_call.1']
    #allocation12 [shape = 'u8[512]{0}', space=smem, size = 0x200, scoped, tag = 'input window, operand 5, single buffered']
    #allocation13 [shape = 'u8[4096]{0}', space=vmem, size = 0x1000, scoped, tag = 'output window, operand 0, single buffered']
    %11 = vsyncpa [#allocation3], 0
    %12 = vsyncpa [#allocation5], 0
    %13 = vsyncpa [#allocation8], 0
    %14 = vsyncpa [#allocation11], 0
    %15 = vsyncpa [#allocation4], 0
    // Predicated region
    $region2: #{tpu_custom_call.1} parent=1 // pred_check
      _
    $region3: #{tpu_custom_call.1} parent=1 // pred_check_branch
      %17 = sbr.rel (0) target = $region5
    $region4: #{tpu_custom_call.1} parent=1 // pred_region
      %s19 = ssub.s32 128, 128
      %20 = vsyncadd [#allocation3], %s19
      %s22 = sshll.u32 [#allocation2], 4
      %s23 = int_to_ptr.vmem [resolvable:$true] %s22
      %25 = dma.hbm_to_vmem [thread:$0]  %s0, 128, %s23, [#allocation3]
    $region5: #{tpu_custom_call.1} parent=1 // pred_fallthru
      _
    // Predicated region
    $region6: #{tpu_custom_call.1} parent=1 // pred_check
      _
    $region7: #{tpu_custom_call.1} parent=1 // pred_check_branch
      %27 = sbr.rel (0) target = $region9
    $region8: #{tpu_custom_call.1} parent=1 // pred_region
      %s29 = ssub.s32 16, 16
      %30 = vsyncadd [#allocation5], %s29
      %s32 = sshll.u32 %s1, 4
      %s33 = int_to_ptr.vmem [resolvable:$true] %s32
      %35 = dma.vmem_to_smem %s33, 16, [#allocation6], [#allocation5]
    $region9: #{tpu_custom_call.1} parent=1 // pred_fallthru
      _
    // Predicated region
    $region10: #{tpu_custom_call.1} parent=1 // pred_check
      _
    $region11: #{tpu_custom_call.1} parent=1 // pred_check_branch
      %37 = sbr.rel (0) target = $region13
    $region12: #{tpu_custom_call.1} parent=1 // pred_region
      %s39 = ssub.s32 16, 16
      %40 = vsyncadd [#allocation8], %s39
      %s42 = sshll.u32 %s2, 4
      %s43 = int_to_ptr.vmem [resolvable:$true] %s42
      %45 = dma.vmem_to_smem %s43, 16, [#allocation7], [#allocation8]
    $region13: #{tpu_custom_call.1} parent=1 // pred_fallthru
      _
    // Predicated region
    $region14: #{tpu_custom_call.1} parent=1 // pred_check
      _
    $region15: #{tpu_custom_call.1} parent=1 // pred_check_branch
      %47 = sbr.rel (0) target = $region17
    $region16: #{tpu_custom_call.1} parent=1 // pred_region
      %s49 = ssub.s32 16, 16
      %50 = vsyncadd [#allocation8], %s49
      %s52 = sshll.u32 %s3, 4
      %s53 = int_to_ptr.vmem [resolvable:$true] %s52
      %55 = dma.vmem_to_smem %s53, 16, [#allocation9], [#allocation8]
    $region17: #{tpu_custom_call.1} parent=1 // pred_fallthru
      _
    // Predicated region
    $region18: #{tpu_custom_call.1} parent=1 // pred_check
      _
    $region19: #{tpu_custom_call.1} parent=1 // pred_check_branch
      %57 = sbr.rel (0) target = $region21
    $region20: #{tpu_custom_call.1} parent=1 // pred_region
      %s59 = ssub.s32 16, 16
      %60 = vsyncadd [#allocation11], %s59
      %s62 = sshll.u32 %s4, 4
      %s63 = int_to_ptr.vmem [resolvable:$true] %s62
      %65 = dma.vmem_to_smem %s63, 16, [#allocation10], [#allocation11]
    $region21: #{tpu_custom_call.1} parent=1 // pred_fallthru
      _
    // Predicated region
    $region22: #{tpu_custom_call.1} parent=1 // pred_check
      _
    $region23: #{tpu_custom_call.1} parent=1 // pred_check_branch
      %67 = sbr.rel (0) target = $region25
    $region24: #{tpu_custom_call.1} parent=1 // pred_region
      %s69 = ssub.s32 16, 16
      %70 = vsyncadd [#allocation11], %s69
      %s72 = sshll.u32 %s5, 4
      %s73 = int_to_ptr.vmem [resolvable:$true] %s72
      %75 = dma.vmem_to_smem %s73, 16, [#allocation12], [#allocation11]
    $region25: #{tpu_custom_call.1} parent=1 // pred_fallthru
      _
    // Predicated region
    $region26: #{tpu_custom_call.1} parent=1 // pred_check
      _
    $region27: #{tpu_custom_call.1} parent=1 // pred_check_branch
      %77 = sbr.rel (0) target = $region29
    $region28: #{tpu_custom_call.1} parent=1 // pred_region
      %78 = dma.done [#allocation3], 128
    $region29: #{tpu_custom_call.1} parent=1 // pred_fallthru
      _
    // Predicated region
    $region30: #{tpu_custom_call.1} parent=1 // pred_check
      _
    $region31: #{tpu_custom_call.1} parent=1 // pred_check_branch
      %80 = sbr.rel (0) target = $region33
    $region32: #{tpu_custom_call.1} parent=1 // pred_region
      %81 = dma.done [#allocation5], 16
    $region33: #{tpu_custom_call.1} parent=1 // pred_fallthru
      _
    // Predicated region
    $region34: #{tpu_custom_call.1} parent=1 // pred_check
      _
    $region35: #{tpu_custom_call.1} parent=1 // pred_check_branch
      %83 = sbr.rel (0) target = $region37
    $region36: #{tpu_custom_call.1} parent=1 // pred_region
      %84 = dma.done [#allocation8], 16
    $region37: #{tpu_custom_call.1} parent=1 // pred_fallthru
      _
    // Predicated region
    $region38: #{tpu_custom_call.1} parent=1 // pred_check
      _
    $region39: #{tpu_custom_call.1} parent=1 // pred_check_branch
      %86 = sbr.rel (0) target = $region41
    $region40: #{tpu_custom_call.1} parent=1 // pred_region
      %87 = dma.done [#allocation8], 16
    $region41: #{tpu_custom_call.1} parent=1 // pred_fallthru
      _
    // Predicated region
    $region42: #{tpu_custom_call.1} parent=1 // pred_check
      _
    $region43: #{tpu_custom_call.1} parent=1 // pred_check_branch
      %89 = sbr.rel (0) target = $region45
    $region44: #{tpu_custom_call.1} parent=1 // pred_region
      %90 = dma.done [#allocation11], 16
    $region45: #{tpu_custom_call.1} parent=1 // pred_fallthru
      _
    // Predicated region
    $region46: #{tpu_custom_call.1} parent=1 // pred_check
      _
    $region47: #{tpu_custom_call.1} parent=1 // pred_check_branch
      %92 = sbr.rel (0) target = $region49
    $region48: #{tpu_custom_call.1} parent=1 // pred_region
      %93 = dma.done [#allocation11], 16
    $region49: #{tpu_custom_call.1} parent=1 // pred_fallthru
      _
    %94 = sfence
    %v95 = vld [vmem:[#allocation2] sm:$0xff]
    %s96 = sld [smem:[#allocation6]]
    %s97 = sld [smem:[#allocation6 + $0x1]]
    %s98 = sld [smem:[#allocation6 + $0x2]]
    %s99 = sld [smem:[#allocation6 + $0x3]]
    %s100 = sld [smem:[#allocation6 + $0x4]]
    %s101 = sld [smem:[#allocation6 + $0x5]]
    %v102 = vstv %s96
    %v103 = vsub.f32 %v95, %v102
    %v104 = vstv %s97
    %v105 = vmul.f32 %v103, %v104
    %v106 = vmax.f32 %v105, -3.0
    %v107 = vmin.f32 %v106, 3.0
    %v108 = vmul.f32 %v107, %v107
    %v109 = vstv %s98
    %v110 = vmul.f32 %v108, %v109
    %s111 = smul.f32 %s99, 2.0
    %v112 = vstv %s111
    %v113 = vmul.f32 %v112, %v107
    %v114 = vadd.f32 %v110, %v113
    %v115 = vstv %s100
    %v116 = vadd.f32 %v114, %v115
    %v117 = vadd.f32 %v116, 1e-05
    %v118 = vrsqrt.pop %v117
    %v119 = vstv %s101
    %s120 = sld [smem:[#allocation7]]
    %v121 = vstv %s120
    %v122 = vmul.f32 %v107, %v121
    %s123 = sld [smem:[#allocation9]]
    %v124 = vstv %s123
    %v125 = vadd.f32 %v122, %v124
    %v126 = vmul.f32 %v125, %v118
    %s127 = sld [smem:[#allocation10]]
    %v128 = vstv %s127
    %v129 = vadd.f32 %v126, %v128
    %v130 = vmax.f32 %v129, 0.0
    %s131 = sld [smem:[#allocation12]]
    %v132 = vstv %s131
    %v133 = vmul.f32 %v130, %v132
    %v134 = vadd.f32 %v119, %v133
    %s135 = sld [smem:[#allocation7 + $0x1]]
    %v136 = vstv %s135
    %v137 = vmul.f32 %v107, %v136
    %s138 = sld [smem:[#allocation9 + $0x1]]
    %v139 = vstv %s138
    %v140 = vadd.f32 %v137, %v139
    %v141 = vmul.f32 %v140, %v118
    %s142 = sld [smem:[#allocation10 + $0x1]]
    %v143 = vstv %s142
    %v144 = vadd.f32 %v141, %v143
    %v145 = vmax.f32 %v144, 0.0
    %s146 = sld [smem:[#allocation12 + $0x1]]
    %v147 = vstv %s146
    %v148 = vmul.f32 %v145, %v147
    %v149 = vadd.f32 %v134, %v148
    %s150 = sld [smem:[#allocation7 + $0x2]]
    %v151 = vstv %s150
    %v152 = vmul.f32 %v107, %v151
    %s153 = sld [smem:[#allocation9 + $0x2]]
    %v154 = vstv %s153
    %v155 = vadd.f32 %v152, %v154
    %v156 = vmul.f32 %v155, %v118
    %s157 = sld [smem:[#allocation10 + $0x2]]
    %v158 = vstv %s157
    %v159 = vadd.f32 %v156, %v158
    %v160 = vmax.f32 %v159, 0.0
    %s161 = sld [smem:[#allocation12 + $0x2]]
    %v162 = vstv %s161
    %v163 = vmul.f32 %v160, %v162
    %v164 = vadd.f32 %v149, %v163
    %s165 = sld [smem:[#allocation7 + $0x3]]
    %v166 = vstv %s165
    %v167 = vmul.f32 %v107, %v166
    %s168 = sld [smem:[#allocation9 + $0x3]]
    %v169 = vstv %s168
    %v170 = vadd.f32 %v167, %v169
    %v171 = vmul.f32 %v170, %v118
    %s172 = sld [smem:[#allocation10 + $0x3]]
    %v173 = vstv %s172
    %v174 = vadd.f32 %v171, %v173
    %v175 = vmax.f32 %v174, 0.0
    %s176 = sld [smem:[#allocation12 + $0x3]]
    %v177 = vstv %s176
    %v178 = vmul.f32 %v175, %v177
    %v179 = vadd.f32 %v164, %v178
    %s180 = sld [smem:[#allocation7 + $0x4]]
    %v181 = vstv %s180
    %v182 = vmul.f32 %v107, %v181
    %s183 = sld [smem:[#allocation9 + $0x4]]
    %v184 = vstv %s183
    %v185 = vadd.f32 %v182, %v184
    %v186 = vmul.f32 %v185, %v118
    %s187 = sld [smem:[#allocation10 + $0x4]]
    %v188 = vstv %s187
    %v189 = vadd.f32 %v186, %v188
    %v190 = vmax.f32 %v189, 0.0
    %s191 = sld [smem:[#allocation12 + $0x4]]
    %v192 = vstv %s191
    %v193 = vmul.f32 %v190, %v192
    %v194 = vadd.f32 %v179, %v193
    %s195 = sld [smem:[#allocation7 + $0x5]]
    %v196 = vstv %s195
    %v197 = vmul.f32 %v107, %v196
    %s198 = sld [smem:[#allocation9 + $0x5]]
    %v199 = vstv %s198
    %v200 = vadd.f32 %v197, %v199
    %v201 = vmul.f32 %v200, %v118
    %s202 = sld [smem:[#allocation10 + $0x5]]
    %v203 = vstv %s202
    %v204 = vadd.f32 %v201, %v203
    %v205 = vmax.f32 %v204, 0.0
    %s206 = sld [smem:[#allocation12 + $0x5]]
    %v207 = vstv %s206
    %v208 = vmul.f32 %v205, %v207
    %v209 = vadd.f32 %v194, %v208
    %s210 = sld [smem:[#allocation7 + $0x6]]
    %v211 = vstv %s210
    %v212 = vmul.f32 %v107, %v211
    %s213 = sld [smem:[#allocation9 + $0x6]]
    %v214 = vstv %s213
    %v215 = vadd.f32 %v212, %v214
    %v216 = vmul.f32 %v215, %v118
    %s217 = sld [smem:[#allocation10 + $0x6]]
    %v218 = vstv %s217
    %v219 = vadd.f32 %v216, %v218
    %v220 = vmax.f32 %v219, 0.0
    %s221 = sld [smem:[#allocation12 + $0x6]]
    %v222 = vstv %s221
    %v223 = vmul.f32 %v220, %v222
    %v224 = vadd.f32 %v209, %v223
    %s225 = sld [smem:[#allocation7 + $0x7]]
    %v226 = vstv %s225
    %v227 = vmul.f32 %v107, %v226
    %s228 = sld [smem:[#allocation9 + $0x7]]
    %v229 = vstv %s228
    %v230 = vadd.f32 %v227, %v229
    %v231 = vmul.f32 %v230, %v118
    %s232 = sld [smem:[#allocation10 + $0x7]]
    %v233 = vstv %s232
    %v234 = vadd.f32 %v231, %v233
    %v235 = vmax.f32 %v234, 0.0
    %s236 = sld [smem:[#allocation12 + $0x7]]
    %v237 = vstv %s236
    %v238 = vmul.f32 %v235, %v237
    %v239 = vadd.f32 %v224, %v238
    %s240 = sld [smem:[#allocation7 + $0x8]]
    %v241 = vstv %s240
    %v242 = vmul.f32 %v107, %v241
    %s243 = sld [smem:[#allocation9 + $0x8]]
    %v244 = vstv %s243
    %v245 = vadd.f32 %v242, %v244
    %v246 = vmul.f32 %v245, %v118
    %s247 = sld [smem:[#allocation10 + $0x8]]
    %v248 = vstv %s247
    %v249 = vadd.f32 %v246, %v248
    %v250 = vmax.f32 %v249, 0.0
    %s251 = sld [smem:[#allocation12 + $0x8]]
    %v252 = vstv %s251
    %v253 = vmul.f32 %v250, %v252
    %v254 = vadd.f32 %v239, %v253
    %s255 = sld [smem:[#allocation7 + $0x9]]
    %v256 = vstv %s255
    %v257 = vmul.f32 %v107, %v256
    %s258 = sld [smem:[#allocation9 + $0x9]]
    %v259 = vstv %s258
    %v260 = vadd.f32 %v257, %v259
    %v261 = vmul.f32 %v260, %v118
    %s262 = sld [smem:[#allocation10 + $0x9]]
    %v263 = vstv %s262
    %v264 = vadd.f32 %v261, %v263
    %v265 = vmax.f32 %v264, 0.0
    %s266 = sld [smem:[#allocation12 + $0x9]]
    %v267 = vstv %s266
    %v268 = vmul.f32 %v265, %v267
    %v269 = vadd.f32 %v254, %v268
    %s270 = sld [smem:[#allocation7 + $0xa]]
    %v271 = vstv %s270
    %v272 = vmul.f32 %v107, %v271
    %s273 = sld [smem:[#allocation9 + $0xa]]
    %v274 = vstv %s273
    %v275 = vadd.f32 %v272, %v274
    %v276 = vmul.f32 %v275, %v118
    %s277 = sld [smem:[#allocation10 + $0xa]]
    %v278 = vstv %s277
    %v279 = vadd.f32 %v276, %v278
    %v280 = vmax.f32 %v279, 0.0
    %s281 = sld [smem:[#allocation12 + $0xa]]
    %v282 = vstv %s281
    %v283 = vmul.f32 %v280, %v282
    %v284 = vadd.f32 %v269, %v283
    %s285 = sld [smem:[#allocation7 + $0xb]]
    %v286 = vstv %s285
    %v287 = vmul.f32 %v107, %v286
    %s288 = sld [smem:[#allocation9 + $0xb]]
    %v289 = vstv %s288
    %v290 = vadd.f32 %v287, %v289
    %v291 = vmul.f32 %v290, %v118
    %s292 = sld [smem:[#allocation10 + $0xb]]
    %v293 = vstv %s292
    %v294 = vadd.f32 %v291, %v293
    %v295 = vmax.f32 %v294, 0.0
    %s296 = sld [smem:[#allocation12 + $0xb]]
    %v297 = vstv %s296
    %v298 = vmul.f32 %v295, %v297
    %v299 = vadd.f32 %v284, %v298
    %s300 = sld [smem:[#allocation7 + $0xc]]
    %v301 = vstv %s300
    %v302 = vmul.f32 %v107, %v301
    %s303 = sld [smem:[#allocation9 + $0xc]]
    %v304 = vstv %s303
    %v305 = vadd.f32 %v302, %v304
    %v306 = vmul.f32 %v305, %v118
    %s307 = sld [smem:[#allocation10 + $0xc]]
    %v308 = vstv %s307
    %v309 = vadd.f32 %v306, %v308
    %v310 = vmax.f32 %v309, 0.0
    %s311 = sld [smem:[#allocation12 + $0xc]]
    %v312 = vstv %s311
    %v313 = vmul.f32 %v310, %v312
    %v314 = vadd.f32 %v299, %v313
    %s315 = sld [smem:[#allocation7 + $0xd]]
    %v316 = vstv %s315
    %v317 = vmul.f32 %v107, %v316
    %s318 = sld [smem:[#allocation9 + $0xd]]
    %v319 = vstv %s318
    %v320 = vadd.f32 %v317, %v319
    %v321 = vmul.f32 %v320, %v118
    %s322 = sld [smem:[#allocation10 + $0xd]]
    %v323 = vstv %s322
    %v324 = vadd.f32 %v321, %v323
    %v325 = vmax.f32 %v324, 0.0
    %s326 = sld [smem:[#allocation12 + $0xd]]
    %v327 = vstv %s326
    %v328 = vmul.f32 %v325, %v327
    %v329 = vadd.f32 %v314, %v328
    %s330 = sld [smem:[#allocation7 + $0xe]]
    %v331 = vstv %s330
    %v332 = vmul.f32 %v107, %v331
    %s333 = sld [smem:[#allocation9 + $0xe]]
    %v334 = vstv %s333
    %v335 = vadd.f32 %v332, %v334
    %v336 = vmul.f32 %v335, %v118
    %s337 = sld [smem:[#allocation10 + $0xe]]
    %v338 = vstv %s337
    %v339 = vadd.f32 %v336, %v338
    %v340 = vmax.f32 %v339, 0.0
    %s341 = sld [smem:[#allocation12 + $0xe]]
    %v342 = vstv %s341
    %v343 = vmul.f32 %v340, %v342
    %v344 = vadd.f32 %v329, %v343
    %s345 = sld [smem:[#allocation7 + $0xf]]
    %v346 = vstv %s345
    %v347 = vmul.f32 %v107, %v346
    %s348 = sld [smem:[#allocation9 + $0xf]]
    %v349 = vstv %s348
    %v350 = vadd.f32 %v347, %v349
    %v351 = vmul.f32 %v350, %v118
    %s352 = sld [smem:[#allocation10 + $0xf]]
    %v353 = vstv %s352
    %v354 = vadd.f32 %v351, %v353
    %v355 = vmax.f32 %v354, 0.0
    %s356 = sld [smem:[#allocation12 + $0xf]]
    %v357 = vstv %s356
    %v358 = vmul.f32 %v355, %v357
    %v359 = vadd.f32 %v344, %v358
    %360 = vst [vmem:[#allocation13] sm:$0xff] %v359
    // Predicated region
    $region50: #{tpu_custom_call.1} parent=1 // pred_check
      _
    $region51: #{tpu_custom_call.1} parent=1 // pred_check_branch
      %362 = sbr.rel (0) target = $region53
    $region52: #{tpu_custom_call.1} parent=1 // pred_region
      %s364 = ssub.s32 128, 128
      %365 = vsyncadd [#allocation4], %s364
      %s367 = sshll.u32 [#allocation13], 4
      %s368 = int_to_ptr.vmem [resolvable:$true] %s367
      %370 = dma.vmem_to_hbm [thread:$0]  %s368, 128, %s6, [#allocation4]
    $region53: #{tpu_custom_call.1} parent=1 // pred_fallthru
      _
    // Predicated region
    $region54: #{tpu_custom_call.1} parent=1 // pred_check
      _
    $region55: #{tpu_custom_call.1} parent=1 // pred_check_branch
      %372 = sbr.rel (0) target = $region57
    $region56: #{tpu_custom_call.1} parent=1 // pred_region
      %373 = dma.done [#allocation4], 128
    $region57: #{tpu_custom_call.1} parent=1 // pred_fallthru
      _
    %374 = vsyncpa [#allocation3], 1
    %375 = vsyncpa [#allocation4], 1
    %376 = vsyncpa [#allocation5], 1
    %377 = vsyncpa [#allocation8], 1
    %378 = vsyncpa [#allocation11], 1

</llo_original>
